<compile_context>
chip_gen: v7x
topology: tpu7x:2x2x1
jax: 0.10.0
libtpu: 0.0.40
codegen_flags: <defaults>
</compile_context>

<pallas_src>
import jax
import jax.numpy as jnp
from jax.experimental import pallas as pl
from jax.experimental.pallas import tpu as pltpu


LANE = 128  # TPU lane width


def _round_up(n, m):
    return ((n + m - 1) // m) * m


def make_mlp_kernel(n_layers, layer_widths, out_size):
    """Fused MLP kernel: n_layers Linears, ReLU between them, Tanh at the end.

    layer_widths[i] is the lane-padded output width of layer i (multiple of
    128).  Only the first `out_size` columns of the final layer are stored.
    """

    def kernel(*refs):
        # refs = (x_ref, w0, w1, ..., w{n-1}, bias_stack, o_ref)
        x_ref = refs[0]
        w_refs = refs[1:1 + n_layers]
        b_ref = refs[1 + n_layers]
        o_ref = refs[-1]

        h = x_ref[...]
        for i in range(n_layers):
            w = w_refs[i][...]                              # bf16 [in_i, width_i]
            b = b_ref[i:i + 1, 0:layer_widths[i]]           # f32  [1, width_i] (lane-dense)
            # bf16 operands on the MXU, f32 accumulation.
            h = jnp.dot(h.astype(jnp.bfloat16), w,
                        preferred_element_type=jnp.float32) + b
            if i < n_layers - 1:
                h = jnp.maximum(h, 0.0)                     # ReLU (VPU, f32)
            else:
                h = jnp.tanh(h)                             # final Tanh (EUP, f32)
        # Narrow store: only the true output columns hit HBM.
        o_ref[...] = h[:, :out_size].astype(o_ref.dtype)

    return kernel


def pack_params(weights, biases, lane=LANE):
    """Prepare parameters once, outside the hot path.

    weights[i]: f32 [in_i, out_i]   (transpose of torch's Linear weight)
    biases[i]:  f32 [out_i]

    All layer output widths are zero-padded up to a multiple of 128 lanes so
    every intermediate activation / weight / bias row is lane-dense inside the
    kernel.  The padding columns are zero, so semantics are unchanged.

    Returns:
      w_list:   list of bf16 weights, shape [in_padded_i, width_i].
      b_stack:  single f32 [n_layers, max_width] array holding all biases.
      widths:   per-layer (padded) output widths as seen by the kernel.
    """
    n = len(weights)
    widths = [_round_up(w.shape[1], lane) for w in weights]

    w_list = []
    prev_padded_in = weights[0].shape[0]  # input dim of layer 0 stays unpadded
    for i, w in enumerate(weights):
        in_i, out_i = w.shape
        pad_in = prev_padded_in - in_i
        pad_out = widths[i] - out_i
        if pad_in or pad_out:
            w = jnp.pad(w, ((0, pad_in), (0, pad_out)))
        w_list.append(w.astype(jnp.bfloat16))
        prev_padded_in = widths[i]

    stack_w = max(widths)
    b_stack = jnp.zeros((n, stack_w), jnp.float32)
    for i, b in enumerate(biases):
        b = jnp.ravel(b).astype(jnp.float32)
        b_stack = b_stack.at[i, : b.shape[0]].set(b)

    return w_list, b_stack, tuple(widths)


def mlp_forward(x, packed, out_size, *, out_dtype=jnp.float32, batch_tile=2048):
    """Run the fused MLP.  packed = pack_params(weights, biases).

    out_dtype=jnp.bfloat16 halves the output HBM writeback when the consumer
    tolerates it (the kernel is memory-bound).
    """
    w_list, b_stack, widths = packed
    n_layers = len(w_list)
    batch, in_size = x.shape
    max_w = max(widths)

    # Batch tile: large enough to amortize the ~0.35 us/step pipeline overhead,
    # multiple of 8 sublanes, and (when the batch allows) capped so the grid
    # has >= 2 steps -> both TensorCores get work on v7x.
    if batch <= 8:
        tb = _round_up(batch, 8)
    else:
        tb = min(batch_tile, _round_up(pl.cdiv(batch, 2), 8))
    tb = max(tb, 8)
    padded_batch = _round_up(batch, tb)
    if padded_batch != batch:
        x = jnp.pad(x, ((0, padded_batch - batch), (0, 0)))
    grid = (padded_batch // tb,)

    kernel = make_mlp_kernel(n_layers, widths, out_size)

    x_itemsize = jnp.dtype(x.dtype).itemsize
    out_itemsize = jnp.dtype(out_dtype).itemsize
    w_bytes = sum(int(w.size) * 2 for w in w_list)          # bf16
    b_bytes = int(b_stack.size) * 4

    # VMEM footprint estimate: resident weights/biases + double-buffered x and
    # out tiles + headroom for the f32 intermediates.
    vmem_bytes = (w_bytes + b_bytes
                  + 2 * tb * in_size * x_itemsize
                  + 2 * tb * out_size * out_itemsize
                  + 2 * tb * max_w * 4)
    vmem_limit = None
    if vmem_bytes > 12 * 1024 * 1024:   # approaching v5e's 16 MiB scoped default
        vmem_limit = min(int(vmem_bytes * 1.25) + (1 << 20), 64 * 1024 * 1024)

    # Single-buffer the constant-index weight/bias operands only when they are
    # actually large enough to matter (guard for big hidden widths on v7x's
    # 64 MiB VMEM); at small sizes skip it entirely.
    single_buffer_consts = (w_bytes + b_bytes) > (1 << 20) and hasattr(pl, "Buffered")

    x_spec = pl.BlockSpec((tb, in_size), lambda i: (i, 0))
    out_spec = pl.BlockSpec((tb, out_size), lambda i: (i, 0))

    def const_spec(shape):
        # Constant index_map -> operand stays resident in VMEM across the grid.
        if single_buffer_consts:
            return pl.BlockSpec(shape, lambda i: (0, 0),
                                pipeline_mode=pl.Buffered(1))
        return pl.BlockSpec(shape, lambda i: (0, 0))

    in_specs = [x_spec]
    in_specs += [const_spec(w.shape) for w in w_list]
    in_specs.append(const_spec(b_stack.shape))

    # Scheduling hint for XLA around this small mem-bound custom call.
    flops = 2 * padded_batch * sum(int(w.shape[0]) * int(w.shape[1]) for w in w_list)
    cost = pl.CostEstimate(
        flops=flops,
        transcendentals=padded_batch * widths[-1],           # tanh
        bytes_accessed=(padded_batch * in_size * x_itemsize
                        + padded_batch * out_size * out_itemsize
                        + w_bytes + b_bytes),
    )

    out = pl.pallas_call(
        kernel,
        out_shape=jax.ShapeDtypeStruct((padded_batch, out_size), out_dtype),
        grid_spec=pltpu.PrefetchScalarGridSpec(
            num_scalar_prefetch=0,
            grid=grid,
            in_specs=in_specs,
            out_specs=out_spec,
        ),
        compiler_params=pltpu.CompilerParams(
            # Batch axis is embarrassingly parallel -> sharded across both
            # TensorCores on v7x; neutral on v5e/v6e.
            dimension_semantics=("parallel",),
            vmem_limit_bytes=vmem_limit,
        ),
        cost_estimate=cost,
    )(x, *w_list, b_stack)

    # Strip batch padding (output columns were never padded in HBM).
    return out[:batch]


def init_params(key, input_size, hidden_sizes, output_size):
    """torch.nn.Linear default init: U(-1/sqrt(fan_in), 1/sqrt(fan_in))."""
    sizes = [input_size] + list(hidden_sizes) + [output_size]
    weights, biases = [], []
    for fan_in, fan_out in zip(sizes[:-1], sizes[1:]):
        key, kw, kb = jax.random.split(key, 3)
        bound = 1.0 / jnp.sqrt(jnp.float32(fan_in))
        weights.append(jax.random.uniform(kw, (fan_in, fan_out), jnp.float32,
                                          -bound, bound))
        biases.append(jax.random.uniform(kb, (fan_out,), jnp.float32,
                                         -bound, bound))
    return weights, biases


def mlp_reference(x, weights, biases):
    """Pure-JAX f32 reference (Linear -> ReLU -> ... -> Linear -> Tanh)."""
    n = len(weights)
    h = x
    for i in range(n):
        h = h @ weights[i] + biases[i]
        h = jnp.maximum(h, 0.0) if i < n - 1 else jnp.tanh(h)
    return h


if __name__ == "__main__":
    # Small shapes consistent with the module: batch=2, input=16, hidden=[32,32], output=8.
    batch = 2
    input_size = 16
    hidden_sizes = [32, 32]
    output_size = 8

    key = jax.random.PRNGKey(0)
    key, kx = jax.random.split(key)
    x = jax.random.normal(kx, (batch, input_size), jnp.float32)
    weights, biases = init_params(key, input_size, hidden_sizes, output_size)

    packed = pack_params(weights, biases)
    out = mlp_forward(x, packed, output_size)
    out = jax.block_until_ready(out)

    ref = mlp_reference(x, weights, biases)
    assert out.shape == (batch, output_size)
    # bf16 MXU inputs (f32 accumulation) vs f32 reference: allow ~1e-2 slack.
    assert jnp.allclose(out, ref, atol=3e-2, rtol=3e-2), "mismatch vs reference"

    print("KERNEL_OK")
</pallas_src>

<mosaic_0001>
module attributes {stable_mosaic.version = 11 : i64} {
  func.func @kernel(%arg0: i32, %arg1: memref<8x16xf32, #tpu.memory_space<vmem>>, %arg2: memref<16x128xbf16, #tpu.memory_space<vmem>>, %arg3: memref<128x128xbf16, #tpu.memory_space<vmem>>, %arg4: memref<128x128xbf16, #tpu.memory_space<vmem>>, %arg5: memref<3x128xf32, #tpu.memory_space<vmem>>, %arg6: memref<8x8xf32, #tpu.memory_space<vmem>>) attributes {dimension_semantics = [#tpu.dimension_semantics<parallel>], iteration_bounds = array<i64: 1>, scalar_prefetch = 0 : i64, scratch_operands = 0 : i64, tpu.core_type = #tpu.core_type<tc>, window_params = [{transform_indices = @transform_0, window_bounds = array<i64: 8, 16>}, {pipeline_mode = #tpu.pipeline_mode<synchronous>, transform_indices = @transform_1, window_bounds = array<i64: 16, 128>}, {pipeline_mode = #tpu.pipeline_mode<synchronous>, transform_indices = @transform_2, window_bounds = array<i64: 128, 128>}, {pipeline_mode = #tpu.pipeline_mode<synchronous>, transform_indices = @transform_3, window_bounds = array<i64: 128, 128>}, {pipeline_mode = #tpu.pipeline_mode<synchronous>, transform_indices = @transform_4, window_bounds = array<i64: 3, 128>}, {transform_indices = @transform_5, window_bounds = array<i64: 8, 8>}]} {
    %c0 = arith.constant 0 : index
    %c0_0 = arith.constant 0 : index
    %0 = vector.load %arg1[%c0, %c0_0] : memref<8x16xf32, #tpu.memory_space<vmem>>, vector<8x16xf32>
    %c0_1 = arith.constant 0 : index
    %c0_2 = arith.constant 0 : index
    %1 = vector.load %arg2[%c0_1, %c0_2] : memref<16x128xbf16, #tpu.memory_space<vmem>>, vector<16x128xbf16>
    %c0_3 = arith.constant 0 : index
    %c0_4 = arith.constant 0 : index
    %2 = vector.load %arg5[%c0_3, %c0_4] : memref<3x128xf32, #tpu.memory_space<vmem>>, vector<1x128xf32>
    %3 = arith.truncf %0 : vector<8x16xf32> to vector<8x16xbf16>
    %cst = arith.constant dense<0.000000e+00> : vector<8x128xf32>
    %4 = tpu.matmul %3, %1, %cst {dimension_numbers = #tpu.dot_dimension_numbers<[1], [0], [0], [1], [0, 0, 1, 1], [], []>} : vector<8x16xbf16>, vector<16x128xbf16>, vector<8x128xf32> -> vector<8x128xf32>
    %5 = vector.broadcast %2 : vector<1x128xf32> to vector<8x128xf32>
    %6 = arith.addf %4, %5 : vector<8x128xf32>
    %cst_5 = arith.constant 0.000000e+00 : f32
    %7 = vector.broadcast %cst_5 : f32 to vector<8x128xf32>
    %8 = arith.maximumf %6, %7 : vector<8x128xf32>
    %c0_6 = arith.constant 0 : index
    %c0_7 = arith.constant 0 : index
    %9 = vector.load %arg3[%c0_6, %c0_7] : memref<128x128xbf16, #tpu.memory_space<vmem>>, vector<128x128xbf16>
    %c1 = arith.constant 1 : index
    %c0_8 = arith.constant 0 : index
    %10 = vector.load %arg5[%c1, %c0_8] : memref<3x128xf32, #tpu.memory_space<vmem>>, vector<1x128xf32>
    %11 = arith.truncf %8 : vector<8x128xf32> to vector<8x128xbf16>
    %cst_9 = arith.constant dense<0.000000e+00> : vector<8x128xf32>
    %12 = tpu.matmul %11, %9, %cst_9 {dimension_numbers = #tpu.dot_dimension_numbers<[1], [0], [0], [1], [0, 0, 1, 1], [], []>} : vector<8x128xbf16>, vector<128x128xbf16>, vector<8x128xf32> -> vector<8x128xf32>
    %13 = vector.broadcast %10 : vector<1x128xf32> to vector<8x128xf32>
    %14 = arith.addf %12, %13 : vector<8x128xf32>
    %cst_10 = arith.constant 0.000000e+00 : f32
    %15 = vector.broadcast %cst_10 : f32 to vector<8x128xf32>
    %16 = arith.maximumf %14, %15 : vector<8x128xf32>
    %c0_11 = arith.constant 0 : index
    %c0_12 = arith.constant 0 : index
    %17 = vector.load %arg4[%c0_11, %c0_12] : memref<128x128xbf16, #tpu.memory_space<vmem>>, vector<128x128xbf16>
    %c2 = arith.constant 2 : index
    %c0_13 = arith.constant 0 : index
    %18 = vector.load %arg5[%c2, %c0_13] : memref<3x128xf32, #tpu.memory_space<vmem>>, vector<1x128xf32>
    %19 = arith.truncf %16 : vector<8x128xf32> to vector<8x128xbf16>
    %cst_14 = arith.constant dense<0.000000e+00> : vector<8x128xf32>
    %20 = tpu.matmul %19, %17, %cst_14 {dimension_numbers = #tpu.dot_dimension_numbers<[1], [0], [0], [1], [0, 0, 1, 1], [], []>} : vector<8x128xbf16>, vector<128x128xbf16>, vector<8x128xf32> -> vector<8x128xf32>
    %21 = vector.broadcast %18 : vector<1x128xf32> to vector<8x128xf32>
    %22 = arith.addf %20, %21 : vector<8x128xf32>
    %23 = math.tanh %22 : vector<8x128xf32>
    %24 = vector.extract_strided_slice %23 {offsets = [0, 0], sizes = [8, 8], strides = [1, 1]} : vector<8x128xf32> to vector<8x8xf32>
    %c0_15 = arith.constant 0 : index
    %c0_16 = arith.constant 0 : index
    %25 = vector.load %arg6[%c0_15, %c0_16] : memref<8x8xf32, #tpu.memory_space<vmem>>, vector<8x8xf32>
    tpu.vector_store %arg6[%c0_15, %c0_16], %24 {strides = array<i32>} : memref<8x8xf32, #tpu.memory_space<vmem>>, vector<8x8xf32>,
    return
  }
  func.func @transform_0(%arg0: i32) -> (i32, i32) {
    %c0_i32 = arith.constant 0 : i32
    %c0_i32_0 = arith.constant 0 : i32
    return %arg0, %c0_i32 : i32, i32
  }
  func.func @transform_1(%arg0: i32) -> (i32, i32) {
    %c0_i32 = arith.constant 0 : i32
    %c0_i32_0 = arith.constant 0 : i32
    %c0_i32_1 = arith.constant 0 : i32
    return %c0_i32, %c0_i32_0 : i32, i32
  }
  func.func @transform_2(%arg0: i32) -> (i32, i32) {
    %c0_i32 = arith.constant 0 : i32
    %c0_i32_0 = arith.constant 0 : i32
    %c0_i32_1 = arith.constant 0 : i32
    return %c0_i32, %c0_i32_0 : i32, i32
  }
  func.func @transform_3(%arg0: i32) -> (i32, i32) {
    %c0_i32 = arith.constant 0 : i32
    %c0_i32_0 = arith.constant 0 : i32
    %c0_i32_1 = arith.constant 0 : i32
    return %c0_i32, %c0_i32_0 : i32, i32
  }
  func.func @transform_4(%arg0: i32) -> (i32, i32) {
    %c0_i32 = arith.constant 0 : i32
    %c0_i32_0 = arith.constant 0 : i32
    %c0_i32_1 = arith.constant 0 : i32
    return %c0_i32, %c0_i32_0 : i32, i32
  }
  func.func @transform_5(%arg0: i32) -> (i32, i32) {
    %c0_i32 = arith.constant 0 : i32
    %c0_i32_0 = arith.constant 0 : i32
    return %arg0, %c0_i32 : i32, i32
  }
}

</mosaic_0001>

<llo_original>
// kernel: tpu_custom_call.1
$region0: #{tpu_custom_call.1}
  #allocation0 [shape = 'u32[]', space=smem, size = 0x4, offset = 0x4, fixed_abs, tag = 'smem constant byte address 0x4 - core index']
  #allocation1 [shape = 'u32[144,128]{1,0:T(1,128)}', space=vmem, size = 0x12000, scoped, tag = 'internal scratch']
  %s0 = inlined_call_operand.hbm [shape: f32[8,16], index: 0, kind: input, shape index: {}]
  %s1 = inlined_call_operand.hbm [shape: bf16[16,128], index: 1, kind: input, shape index: {}]
  %s2 = inlined_call_operand.hbm [shape: bf16[128,128], index: 2, kind: input, shape index: {}]
  %s3 = inlined_call_operand.hbm [shape: bf16[128,128], index: 3, kind: input, shape index: {}]
  %s4 = inlined_call_operand.vmem [shape: f32[3,128], index: 4, kind: input, shape index: {}]
  %s5 = inlined_call_operand.hbm [shape: f32[8,8], index: 5, kind: output, shape index: {}]
  %s6 = sld [smem:[#allocation0]]
  $region46: #{tpu_custom_call.1} parent=0
    _
  %s8 = ssub.s32 1, %s6
  %s9 = scalar_select 0, %s8, %s6
  $region1: #{tpu_custom_call.1} parent=0
    #allocation2 [shape = 'u8[4096]{0}', space=vmem, size = 0x1000, scoped, tag = 'input window, operand 0, single buffered']
    #allocation3 [shape = 's32[1]{0}', space=sflag, size = 0x4, scoped, tag = 'scoped memory for tpu_custom_call.1']
    #allocation4 [shape = 's32[1]{0}', space=sflag, size = 0x4, scoped, tag = 'scoped memory for tpu_custom_call.1']
    #allocation5 [shape = 'u8[4096]{0}', space=vmem, size = 0x1000, scoped, tag = 'input window, operand 1, single buffered']
    #allocation6 [shape = 's32[1]{0}', space=sflag, size = 0x4, scoped, tag = 'scoped memory for tpu_custom_call.1']
    #allocation7 [shape = 'u8[32768]{0}', space=vmem, size = 0x8000, scoped, tag = 'input window, operand 2, single buffered']
    #allocation8 [shape = 'u8[32768]{0}', space=vmem, size = 0x8000, scoped, tag = 'input window, operand 3, single buffered']
    #allocation9 [shape = 's32[1]{0}', space=sflag, size = 0x4, scoped, tag = 'scoped memory for tpu_custom_call.1']
    #allocation10 [shape = 'u8[4096]{0}', space=vmem, size = 0x1000, scoped, tag = 'output window, operand 0, single buffered']
    %10 = vsyncpa [#allocation3], 0
    %11 = vsyncpa [#allocation6], 0
    %12 = vsyncpa [#allocation9], 0
    %13 = vsyncpa [#allocation4], 0
    // Predicated region
    $region2: #{tpu_custom_call.1} parent=1 // pred_check
      _
    $region3: #{tpu_custom_call.1} parent=1 // pred_check_branch
      %15 = sbr.rel (0) target = $region5
    $region4: #{tpu_custom_call.1} parent=1 // pred_region
      %s17 = ssub.s32 128, 128
      %18 = vsyncadd [#allocation3], %s17
      %s20 = sshll.u32 [#allocation2], 4
      %s21 = int_to_ptr.vmem [resolvable:$true] %s20
      %23 = dma.hbm_to_vmem [thread:$0]  %s0, 128, %s21, [#allocation3]
    $region5: #{tpu_custom_call.1} parent=1 // pred_fallthru
      _
    // Predicated region
    $region6: #{tpu_custom_call.1} parent=1 // pred_check
      _
    $region7: #{tpu_custom_call.1} parent=1 // pred_check_branch
      %25 = sbr.rel (0) target = $region9
    $region8: #{tpu_custom_call.1} parent=1 // pred_region
      %s27 = ssub.s32 128, 128
      %28 = vsyncadd [#allocation6], %s27
      %s29 = sshll.u32 [#allocation5], 4
      %s30 = int_to_ptr.vmem [resolvable:$true] %s29
      %35 = dma.hbm_to_vmem [thread:$0]  %s1, 128, %s30, [#allocation6], 64, 64, 4
    $region9: #{tpu_custom_call.1} parent=1 // pred_fallthru
      _
    // Predicated region
    $region10: #{tpu_custom_call.1} parent=1 // pred_check
      _
    $region11: #{tpu_custom_call.1} parent=1 // pred_check_branch
      %37 = sbr.rel (0) target = $region13
    $region12: #{tpu_custom_call.1} parent=1 // pred_region
      %s39 = ssub.s32 1024, 1024
      %40 = vsyncadd [#allocation6], %s39
      %s41 = sshll.u32 [#allocation7], 4
      %s42 = int_to_ptr.vmem [resolvable:$true] %s41
      %47 = dma.hbm_to_vmem [thread:$0]  %s2, 1024, %s42, [#allocation6], 64, 64, 4
    $region13: #{tpu_custom_call.1} parent=1 // pred_fallthru
      _
    // Predicated region
    $region14: #{tpu_custom_call.1} parent=1 // pred_check
      _
    $region15: #{tpu_custom_call.1} parent=1 // pred_check_branch
      %49 = sbr.rel (0) target = $region17
    $region16: #{tpu_custom_call.1} parent=1 // pred_region
      %s51 = ssub.s32 1024, 1024
      %52 = vsyncadd [#allocation9], %s51
      %s53 = sshll.u32 [#allocation8], 4
      %s54 = int_to_ptr.vmem [resolvable:$true] %s53
      %59 = dma.hbm_to_vmem [thread:$0]  %s3, 1024, %s54, [#allocation9], 64, 64, 4
    $region17: #{tpu_custom_call.1} parent=1 // pred_fallthru
      _
    // Predicated region
    $region18: #{tpu_custom_call.1} parent=1 // pred_check
      _
    $region19: #{tpu_custom_call.1} parent=1 // pred_check_branch
      %61 = sbr.rel (0) target = $region21
    $region20: #{tpu_custom_call.1} parent=1 // pred_region
      _
    $region21: #{tpu_custom_call.1} parent=1 // pred_fallthru
      _
    // Predicated region
    $region22: #{tpu_custom_call.1} parent=1 // pred_check
      _
    $region23: #{tpu_custom_call.1} parent=1 // pred_check_branch
      %63 = sbr.rel (0) target = $region25
    $region24: #{tpu_custom_call.1} parent=1 // pred_region
      %64 = dma.done [#allocation3], 128
    $region25: #{tpu_custom_call.1} parent=1 // pred_fallthru
      _
    // Predicated region
    $region26: #{tpu_custom_call.1} parent=1 // pred_check
      _
    $region27: #{tpu_custom_call.1} parent=1 // pred_check_branch
      %66 = sbr.rel (0) target = $region29
    $region28: #{tpu_custom_call.1} parent=1 // pred_region
      %67 = dma.done [#allocation6], 128
    $region29: #{tpu_custom_call.1} parent=1 // pred_fallthru
      _
    // Predicated region
    $region30: #{tpu_custom_call.1} parent=1 // pred_check
      _
    $region31: #{tpu_custom_call.1} parent=1 // pred_check_branch
      %69 = sbr.rel (0) target = $region33
    $region32: #{tpu_custom_call.1} parent=1 // pred_region
      %70 = dma.done [#allocation6], 1024
    $region33: #{tpu_custom_call.1} parent=1 // pred_fallthru
      _
    // Predicated region
    $region34: #{tpu_custom_call.1} parent=1 // pred_check
      _
    $region35: #{tpu_custom_call.1} parent=1 // pred_check_branch
      %72 = sbr.rel (0) target = $region37
    $region36: #{tpu_custom_call.1} parent=1 // pred_region
      %73 = dma.done [#allocation9], 1024
    $region37: #{tpu_custom_call.1} parent=1 // pred_fallthru
      _
    %v75 = vld [vmem:[#allocation2] sm:$0xff]
    %v76 = vld [vmem:[#allocation5] sm:$0xf]
    %v77 = vld [vmem:[#allocation5 + $0x4] sm:$0xf]
    %v78 = vld [vmem:[%s4] sm:$0x1]
    %v79 = vpack.c.bf16 %v75, %v75
    %v80 = vlaneseq
    %v81 = vshrl.u32 %v80, 7
    %v82 = vsub.s32 0, %v81
    %v83 = vrot.slane %v78, %v82
    %v86 = vunpack.c.l.b16 %v76
    %v87 = vunpack.c.l.b16 %v77
    %v88 = vpack.c.b16 %v87, %v86
    %vm90 = vcmask 130048
    %v92 = vsel %vm90, %v79, 0
    %94 = vmatprep.subr.bf16.mxu0 0
    %95 = vmatpush1.bf16.msra.mxu0 %v88
    %96 = vmatprep.subr.bf16.mxu0 0
    %97 = vmatpush1.bf16.msra.mxu0 0
    %98 = vmatprep.subr.bf16.mxu0 0
    %99 = vmatpush1.bf16.msra.mxu0 0
    %100 = vmatprep.subr.bf16.mxu0 0
    %101 = vmatpush1.bf16.msra.mxu0 0
    %102 = vmatprep.subr.bf16.mxu0 0
    %103 = vmatpush1.bf16.msra.mxu0 0
    %104 = vmatprep.subr.bf16.mxu0 0
    %105 = vmatpush1.bf16.msra.mxu0 0
    %106 = vmatprep.subr.bf16.mxu0 0
    %107 = vmatpush1.bf16.msra.mxu0 0
    %108 = vmatprep.subr.bf16.mxu0 0
    %109 = vmatpush1.bf16.msra.mxu0 0
    %110 = vmatprep.subr.bf16.mxu0 0
    %111 = vmatpush1.bf16.msra.mxu0 0
    %112 = vmatprep.subr.bf16.mxu0 0
    %113 = vmatpush1.bf16.msra.mxu0 0
    %114 = vmatprep.subr.bf16.mxu0 0
    %115 = vmatpush1.bf16.msra.mxu0 0
    %116 = vmatprep.subr.bf16.mxu0 0
    %117 = vmatpush1.bf16.msra.mxu0 0
    %118 = vmatprep.subr.bf16.mxu0 0
    %119 = vmatpush1.bf16.msra.mxu0 0
    %120 = vmatprep.subr.bf16.mxu0 0
    %121 = vmatpush1.bf16.msra.mxu0 0
    %122 = vmatprep.subr.bf16.mxu0 0
    %123 = vmatpush1.bf16.msra.mxu0 0
    %124 = vmatprep.subr.bf16.mxu0 0
    %125 = vmatpush1.bf16.msra.mxu0 0
    %126 = vmatprep.mubr.bf16.mxu0 0
    %127 = vmatmul.mubr.bf16.gmra.mrb[0].mxu0 %v92
    %v128 = vpop.f32.mrb[0].mxu0
    %v129 = vadd.f32 %v83, %v128
    %v130 = vpop.f32.mrb[0].mxu0
    %v131 = vpop.f32.mrb[0].mxu0
    %v132 = vpop.f32.mrb[0].mxu0
    %133 = vdwg.mxu0
    %v134 = vmax.f32 %v129, 0.0
    %v135 = vld [vmem:[#allocation7] sm:$0xf]
    %v136 = vld [vmem:[#allocation7 + $0x4] sm:$0xf]
    %v137 = vld [vmem:[#allocation7 + $0x8] sm:$0xf]
    %v138 = vld [vmem:[#allocation7 + $0xc] sm:$0xf]
    %v139 = vld [vmem:[#allocation7 + $0x10] sm:$0xf]
    %v140 = vld [vmem:[#allocation7 + $0x14] sm:$0xf]
    %v141 = vld [vmem:[#allocation7 + $0x18] sm:$0xf]
    %v142 = vld [vmem:[#allocation7 + $0x1c] sm:$0xf]
    %v143 = vld [vmem:[#allocation7 + $0x20] sm:$0xf]
    %v144 = vld [vmem:[#allocation7 + $0x24] sm:$0xf]
    %v145 = vld [vmem:[#allocation7 + $0x28] sm:$0xf]
    %v146 = vld [vmem:[#allocation7 + $0x2c] sm:$0xf]
    %v147 = vld [vmem:[#allocation7 + $0x30] sm:$0xf]
    %v148 = vld [vmem:[#allocation7 + $0x34] sm:$0xf]
    %v149 = vld [vmem:[#allocation7 + $0x38] sm:$0xf]
    %v150 = vld [vmem:[#allocation7 + $0x3c] sm:$0xf]
    %v151 = vld [vmem:[%s4 + $0x1] sm:$0x1]
    %v152 = vpack.c.bf16 %v134, %v134
    %v153 = vlaneseq
    %v154 = vshrl.u32 %v153, 7
    %v155 = vsub.s32 0, %v154
    %v156 = vrot.slane %v151, %v155
    %v173 = vunpack.c.l.b16 %v135
    %v174 = vunpack.c.l.b16 %v136
    %v175 = vunpack.c.l.b16 %v137
    %v176 = vunpack.c.l.b16 %v138
    %v177 = vunpack.c.l.b16 %v139
    %v178 = vunpack.c.l.b16 %v140
    %v179 = vunpack.c.l.b16 %v141
    %v180 = vunpack.c.l.b16 %v142
    %v181 = vunpack.c.l.b16 %v143
    %v182 = vunpack.c.l.b16 %v144
    %v183 = vunpack.c.l.b16 %v145
    %v184 = vunpack.c.l.b16 %v146
    %v185 = vunpack.c.l.b16 %v147
    %v186 = vunpack.c.l.b16 %v148
    %v187 = vunpack.c.l.b16 %v149
    %v188 = vunpack.c.l.b16 %v150
    %v189 = vpack.c.b16 %v174, %v173
    %v190 = vpack.c.b16 %v176, %v175
    %v191 = vpack.c.b16 %v178, %v177
    %v192 = vpack.c.b16 %v180, %v179
    %v193 = vpack.c.b16 %v182, %v181
    %v194 = vpack.c.b16 %v184, %v183
    %v195 = vpack.c.b16 %v186, %v185
    %v196 = vpack.c.b16 %v188, %v187
    %205 = vmatprep.subr.bf16.mxu0 0
    %206 = vmatpush1.bf16.msra.mxu0 %v189
    %207 = vmatprep.subr.bf16.mxu0 0
    %208 = vmatpush1.bf16.msra.mxu0 %v190
    %209 = vmatprep.subr.bf16.mxu0 0
    %210 = vmatpush1.bf16.msra.mxu0 %v191
    %211 = vmatprep.subr.bf16.mxu0 0
    %212 = vmatpush1.bf16.msra.mxu0 %v192
    %213 = vmatprep.subr.bf16.mxu0 0
    %214 = vmatpush1.bf16.msra.mxu0 %v193
    %215 = vmatprep.subr.bf16.mxu0 0
    %216 = vmatpush1.bf16.msra.mxu0 %v194
    %217 = vmatprep.subr.bf16.mxu0 0
    %218 = vmatpush1.bf16.msra.mxu0 %v195
    %219 = vmatprep.subr.bf16.mxu0 0
    %220 = vmatpush1.bf16.msra.mxu0 %v196
    %221 = vmatprep.subr.bf16.mxu0 0
    %222 = vmatpush1.bf16.msra.mxu0 0
    %223 = vmatprep.subr.bf16.mxu0 0
    %224 = vmatpush1.bf16.msra.mxu0 0
    %225 = vmatprep.subr.bf16.mxu0 0
    %226 = vmatpush1.bf16.msra.mxu0 0
    %227 = vmatprep.subr.bf16.mxu0 0
    %228 = vmatpush1.bf16.msra.mxu0 0
    %229 = vmatprep.subr.bf16.mxu0 0
    %230 = vmatpush1.bf16.msra.mxu0 0
    %231 = vmatprep.subr.bf16.mxu0 0
    %232 = vmatpush1.bf16.msra.mxu0 0
    %233 = vmatprep.subr.bf16.mxu0 0
    %234 = vmatpush1.bf16.msra.mxu0 0
    %235 = vmatprep.subr.bf16.mxu0 0
    %236 = vmatpush1.bf16.msra.mxu0 0
    %237 = vmatprep.mubr.bf16.mxu0 0
    %238 = vmatmul.mubr.bf16.gmra.mrb[0].mxu0 %v152
    %v239 = vpop.f32.mrb[0].mxu0
    %v240 = vadd.f32 %v156, %v239
    %v241 = vpop.f32.mrb[0].mxu0
    %v242 = vpop.f32.mrb[0].mxu0
    %v243 = vpop.f32.mrb[0].mxu0
    %244 = vdwg.mxu0
    %v245 = vmax.f32 %v240, 0.0
    %v246 = vld [vmem:[#allocation8] sm:$0xf]
    %v247 = vld [vmem:[#allocation8 + $0x4] sm:$0xf]
    %v248 = vld [vmem:[#allocation8 + $0x8] sm:$0xf]
    %v249 = vld [vmem:[#allocation8 + $0xc] sm:$0xf]
    %v250 = vld [vmem:[#allocation8 + $0x10] sm:$0xf]
    %v251 = vld [vmem:[#allocation8 + $0x14] sm:$0xf]
    %v252 = vld [vmem:[#allocation8 + $0x18] sm:$0xf]
    %v253 = vld [vmem:[#allocation8 + $0x1c] sm:$0xf]
    %v254 = vld [vmem:[#allocation8 + $0x20] sm:$0xf]
    %v255 = vld [vmem:[#allocation8 + $0x24] sm:$0xf]
    %v256 = vld [vmem:[#allocation8 + $0x28] sm:$0xf]
    %v257 = vld [vmem:[#allocation8 + $0x2c] sm:$0xf]
    %v258 = vld [vmem:[#allocation8 + $0x30] sm:$0xf]
    %v259 = vld [vmem:[#allocation8 + $0x34] sm:$0xf]
    %v260 = vld [vmem:[#allocation8 + $0x38] sm:$0xf]
    %v261 = vld [vmem:[#allocation8 + $0x3c] sm:$0xf]
    %v262 = vld [vmem:[%s4 + $0x2] sm:$0x1]
    %v263 = vpack.c.bf16 %v245, %v245
    %v264 = vlaneseq
    %v265 = vshrl.u32 %v264, 7
    %v266 = vsub.s32 0, %v265
    %v267 = vrot.slane %v262, %v266
    %v284 = vunpack.c.l.b16 %v246
    %v285 = vunpack.c.l.b16 %v247
    %v286 = vunpack.c.l.b16 %v248
    %v287 = vunpack.c.l.b16 %v249
    %v288 = vunpack.c.l.b16 %v250
    %v289 = vunpack.c.l.b16 %v251
    %v290 = vunpack.c.l.b16 %v252
    %v291 = vunpack.c.l.b16 %v253
    %v292 = vunpack.c.l.b16 %v254
    %v293 = vunpack.c.l.b16 %v255
    %v294 = vunpack.c.l.b16 %v256
    %v295 = vunpack.c.l.b16 %v257
    %v296 = vunpack.c.l.b16 %v258
    %v297 = vunpack.c.l.b16 %v259
    %v298 = vunpack.c.l.b16 %v260
    %v299 = vunpack.c.l.b16 %v261
    %v300 = vpack.c.b16 %v285, %v284
    %v301 = vpack.c.b16 %v287, %v286
    %v302 = vpack.c.b16 %v289, %v288
    %v303 = vpack.c.b16 %v291, %v290
    %v304 = vpack.c.b16 %v293, %v292
    %v305 = vpack.c.b16 %v295, %v294
    %v306 = vpack.c.b16 %v297, %v296
    %v307 = vpack.c.b16 %v299, %v298
    %316 = vmatprep.subr.bf16.mxu0 0
    %317 = vmatpush1.bf16.msra.mxu0 %v300
    %318 = vmatprep.subr.bf16.mxu0 0
    %319 = vmatpush1.bf16.msra.mxu0 %v301
    %320 = vmatprep.subr.bf16.mxu0 0
    %321 = vmatpush1.bf16.msra.mxu0 %v302
    %322 = vmatprep.subr.bf16.mxu0 0
    %323 = vmatpush1.bf16.msra.mxu0 %v303
    %324 = vmatprep.subr.bf16.mxu0 0
    %325 = vmatpush1.bf16.msra.mxu0 %v304
    %326 = vmatprep.subr.bf16.mxu0 0
    %327 = vmatpush1.bf16.msra.mxu0 %v305
    %328 = vmatprep.subr.bf16.mxu0 0
    %329 = vmatpush1.bf16.msra.mxu0 %v306
    %330 = vmatprep.subr.bf16.mxu0 0
    %331 = vmatpush1.bf16.msra.mxu0 %v307
    %332 = vmatprep.subr.bf16.mxu0 0
    %333 = vmatpush1.bf16.msra.mxu0 0
    %334 = vmatprep.subr.bf16.mxu0 0
    %335 = vmatpush1.bf16.msra.mxu0 0
    %336 = vmatprep.subr.bf16.mxu0 0
    %337 = vmatpush1.bf16.msra.mxu0 0
    %338 = vmatprep.subr.bf16.mxu0 0
    %339 = vmatpush1.bf16.msra.mxu0 0
    %340 = vmatprep.subr.bf16.mxu0 0
    %341 = vmatpush1.bf16.msra.mxu0 0
    %342 = vmatprep.subr.bf16.mxu0 0
    %343 = vmatpush1.bf16.msra.mxu0 0
    %344 = vmatprep.subr.bf16.mxu0 0
    %345 = vmatpush1.bf16.msra.mxu0 0
    %346 = vmatprep.subr.bf16.mxu0 0
    %347 = vmatpush1.bf16.msra.mxu0 0
    %348 = vmatprep.mubr.bf16.mxu0 0
    %349 = vmatmul.mubr.bf16.gmra.mrb[0].mxu0 %v263
    %v350 = vpop.f32.mrb[0].mxu0
    %v351 = vadd.f32 %v267, %v350
    %v352 = vpop.f32.mrb[0].mxu0
    %v353 = vpop.f32.mrb[0].mxu0
    %v354 = vpop.f32.mrb[0].mxu0
    %355 = vdwg.mxu0
    %v356 = vtanh.pop %v351
    %vm357 = vcmask 64512
    %358 = vst.msk [vmem:[#allocation10] sm:$0xff] %vm357, %v356
    // Predicated region
    $region38: #{tpu_custom_call.1} parent=1 // pred_check
      _
    $region39: #{tpu_custom_call.1} parent=1 // pred_check_branch
      %360 = sbr.rel (0) target = $region41
    $region40: #{tpu_custom_call.1} parent=1 // pred_region
      %s362 = ssub.s32 128, 128
      %363 = vsyncadd [#allocation4], %s362
      %s365 = sshll.u32 [#allocation10], 4
      %s366 = int_to_ptr.vmem [resolvable:$true] %s365
      %368 = dma.vmem_to_hbm [thread:$0]  %s366, 128, %s5, [#allocation4]
    $region41: #{tpu_custom_call.1} parent=1 // pred_fallthru
      _
    // Predicated region
    $region42: #{tpu_custom_call.1} parent=1 // pred_check
      _
    $region43: #{tpu_custom_call.1} parent=1 // pred_check_branch
      %370 = sbr.rel (0) target = $region45
    $region44: #{tpu_custom_call.1} parent=1 // pred_region
      %371 = dma.done [#allocation4], 128
    $region45: #{tpu_custom_call.1} parent=1 // pred_fallthru
      _
    %372 = vsyncpa [#allocation3], 1
    %373 = vsyncpa [#allocation6], 1
    %374 = vsyncpa [#allocation9], 1
    %375 = vsyncpa [#allocation4], 1

</llo_original>
